<compile_context>
chip_gen: v7x
topology: tpu7x:2x2x1
jax: 0.10.0
libtpu: 0.0.40
codegen_flags: <defaults>
</compile_context>

<pallas_src>
import jax
import jax.numpy as jnp
from jax.experimental import pallas as pl
from jax.experimental.pallas import tpu as pltpu


# ----------------------------- math helpers --------------------------------

def _erf_approx(z):
    """Abramowitz & Stegun 7.1.26 erf approximation (max abs err ~1.5e-7)."""
    p = 0.3275911
    a1, a2, a3, a4, a5 = (0.254829592, -0.284496736, 1.421413741,
                          -1.453152027, 1.061405429)
    az = jnp.abs(z)
    # TODO(synk): on v5e, if the VALU binds, t = pl.reciprocal(1 + p*az,
    # approx=True) moves the divide onto the EUP (loosens tolerance ~2^-12).
    t = 1.0 / (1.0 + p * az)
    poly = ((((a5 * t + a4) * t + a3) * t + a2) * t + a1) * t
    y = 1.0 - poly * jnp.exp(-az * az)
    return jnp.where(z >= 0.0, y, -y)


def _gelu_exact(x):
    """Exact-erf GELU (matches torch.nn.GELU() default, approximate='none')."""
    inv_sqrt2 = 0.7071067811865476
    return 0.5 * x * (1.0 + _erf_approx(x * inv_sqrt2))


def _round_up(v, m):
    return ((v + m - 1) // m) * m


# ------------------------------- kernel -------------------------------------

def _mlp_kernel(x_ref, w1_ref, b1_ref, w2_ref, b2_ref, o_ref, acc_ref):
    # x_ref : (tm, Ep)  bf16          w1_ref: (Ep, tH) bf16   b1_ref: (1, tH) f32
    # w2_ref: (tH, Ep)  bf16          b2_ref: (1, Ep)  f32
    # o_ref : (tm, Ep)  out dtype     acc_ref: (tm, Ep) f32 scratch
    j = pl.program_id(1)

    @pl.when(j == 0)
    def _():
        acc_ref[...] = jnp.zeros_like(acc_ref)

    # First projection (bf16 MXU operands, f32 accumulation) + bias + GELU.
    h = jnp.dot(x_ref[...], w1_ref[...], preferred_element_type=jnp.float32)
    h = _gelu_exact(h + b1_ref[...])

    # Second projection, accumulated over H chunks in f32.
    acc_ref[...] += jnp.dot(h.astype(w2_ref.dtype), w2_ref[...],
                            preferred_element_type=jnp.float32)

    @pl.when(j == pl.num_programs(1) - 1)
    def _():
        o_ref[...] = (acc_ref[...] + b2_ref[...]).astype(o_ref.dtype)


# ------------------------------ host wrapper --------------------------------

def _vmem_estimate(tm, Ep, tH, out_itemsize, resident):
    """Rough VMEM footprint (bytes) for one pipelined step."""
    w_buf = 1 if resident else 2
    return (Ep * tH * 2 * w_buf          # W1 tile(s), bf16
            + tH * Ep * 2 * w_buf        # W2 tile(s), bf16
            + 8 * tH * 4 + 8 * Ep * 4    # biases (sublane-padded), f32
            + 2 * tm * Ep * 2            # x tile, double-buffered, bf16
            + 2 * tm * Ep * out_itemsize # out tile, double-buffered
            + tm * Ep * 4                # f32 accumulator scratch
            + 3 * tm * tH * 4)           # hidden tile + GELU temporaries


def _choose_th(tm, Ep, Hp, out_itemsize, budget_bytes=40 << 20):
    """Largest multiple of 128 dividing Hp whose footprint fits the budget."""
    cands = sorted({k * 128 for k in range(1, Hp // 128 + 1)
                    if Hp % (k * 128) == 0}, reverse=True)
    for th in cands:
        if _vmem_estimate(tm, Ep, th, out_itemsize, th == Hp) <= budget_bytes:
            return th
    return cands[-1]


def _choose_tm(M):
    if M >= 1024:
        return 512
    # Aim for >= 2 grid steps along the "parallel" axis (v7x has 2 TCs);
    # keep the tile a multiple of 8 sublanes.
    return min(512, max(8, _round_up(pl.cdiv(M, 2), 8)))


def prepare_mlp_params(w1, b1, w2, b2):
    """One-time prep: transpose to x@W layout, lane-pad E/H to 128, cast
    weights to bf16 (biases stay f32)."""
    H, E = w1.shape
    assert w2.shape == (E, H)
    Ep = _round_up(E, 128)
    Hp = _round_up(H, 128)

    w1_t = jnp.zeros((Ep, Hp), jnp.float32).at[:E, :H].set(w1.T)
    w2_t = jnp.zeros((Hp, Ep), jnp.float32).at[:H, :E].set(w2.T)
    b1_p = jnp.zeros((1, Hp), jnp.float32).at[0, :H].set(b1)
    b2_p = jnp.zeros((1, Ep), jnp.float32).at[0, :E].set(b2)

    return {
        "w1_t": w1_t.astype(jnp.bfloat16),
        "w2_t": w2_t.astype(jnp.bfloat16),
        "b1": b1_p,
        "b2": b2_p,
        "E": E, "H": H, "Ep": Ep, "Hp": Hp,
    }


def mlp_forward(x, kparams):
    """x: (B, S, E) float32/bfloat16. Returns (B, S, E) in x.dtype."""
    B, S, E = x.shape
    assert E == kparams["E"]
    Ep, Hp = kparams["Ep"], kparams["Hp"]
    out_dtype = x.dtype
    out_itemsize = jnp.dtype(out_dtype).itemsize

    M = B * S
    tm = _choose_tm(M)
    Mp = _round_up(M, tm)
    num_m = Mp // tm

    tH = _choose_th(tm, Ep, Hp, out_itemsize)
    num_h = Hp // tH
    resident = (num_h == 1)

    # Pad rows/lanes with zeros and feed the MXU bf16 operands.
    x2 = x.reshape(M, E)
    x2 = jnp.zeros((Mp, Ep), jnp.bfloat16).at[:M, :E].set(
        x2.astype(jnp.bfloat16))

    # Constant-index operands: single-buffered (no re-DMA happens anyway).
    w_mode = pl.Buffered(1) if resident else None

    est = _vmem_estimate(tm, Ep, tH, out_itemsize, resident)
    vmem_limit = int(min(max(int(est * 1.5) + (4 << 20), 8 << 20), 64 << 20))

    out2 = pl.pallas_call(
        _mlp_kernel,
        out_shape=jax.ShapeDtypeStruct((Mp, Ep), out_dtype),
        grid=(num_m, num_h),
        in_specs=[
            pl.BlockSpec((tm, Ep), lambda i, j: (i, 0)),                  # x rows
            pl.BlockSpec((Ep, tH), lambda i, j: (0, j),
                         pipeline_mode=w_mode),                           # W1^T
            pl.BlockSpec((1, tH), lambda i, j: (0, j),
                         pipeline_mode=w_mode),                           # b1
            pl.BlockSpec((tH, Ep), lambda i, j: (j, 0),
                         pipeline_mode=w_mode),                           # W2^T
            pl.BlockSpec((1, Ep), lambda i, j: (0, 0),
                         pipeline_mode=pl.Buffered(1)),                   # b2
        ],
        out_specs=pl.BlockSpec((tm, Ep), lambda i, j: (i, 0)),
        scratch_shapes=[pltpu.VMEM((tm, Ep), jnp.float32)],
        compiler_params=pltpu.CompilerParams(
            dimension_semantics=("parallel", "arbitrary"),
            vmem_limit_bytes=vmem_limit),
    )(x2, kparams["w1_t"], kparams["b1"], kparams["w2_t"], kparams["b2"])

    return out2[:M, :E].reshape(B, S, E)


# ------------------------------ reference -----------------------------------

def _reference(x, w1, b1, w2, b2):
    """Plain-JAX f32 reference mirroring the PyTorch module."""
    h = x @ w1.T + b1
    h = jax.nn.gelu(h, approximate=False)      # nn.GELU() default = exact erf
    return h @ w2.T + b2


# --------------------------------- main --------------------------------------

if __name__ == "__main__":
    # Small shapes consistent with the ViT context: embedding_dim=48, ratio=4.
    B, S, E = 2, 8, 48
    ratio = 4
    H = E * ratio

    key = jax.random.PRNGKey(0)
    k1, k2, k3, k4, k5 = jax.random.split(key, 5)
    # PyTorch Linear stores weight as (out_features, in_features).
    w1 = 0.05 * jax.random.normal(k1, (H, E), jnp.float32)
    b1 = 0.05 * jax.random.normal(k2, (H,), jnp.float32)
    w2 = 0.05 * jax.random.normal(k3, (E, H), jnp.float32)
    b2 = 0.05 * jax.random.normal(k4, (E,), jnp.float32)
    x = jax.random.normal(k5, (B, S, E), jnp.float32)

    # One-time parameter prep (transpose + pad + bf16 cast hoisted off the
    # per-call path).
    kparams = prepare_mlp_params(w1, b1, w2, b2)

    out = mlp_forward(x, kparams)
    out = jax.block_until_ready(out)

    ref = _reference(x, w1, b1, w2, b2)
    assert out.shape == (B, S, E)
    # Tolerance accounts for bf16 MXU operands (f32 accumulation).
    assert jnp.allclose(out, ref, atol=2e-2, rtol=2e-2), "mismatch vs reference"

    print("KERNEL_OK")
</pallas_src>

<mosaic_0001>
module attributes {stable_mosaic.version = 11 : i64} {
  func.func @_mlp_kernel(%arg0: i32, %arg1: i32, %arg2: memref<8x128xbf16, #tpu.memory_space<vmem>>, %arg3: memref<128x256xbf16, #tpu.memory_space<vmem>>, %arg4: memref<1x256xf32, #tpu.memory_space<vmem>>, %arg5: memref<256x128xbf16, #tpu.memory_space<vmem>>, %arg6: memref<1x128xf32, #tpu.memory_space<vmem>>, %arg7: memref<8x128xf32, #tpu.memory_space<vmem>>, %arg8: memref<8x128xf32, #tpu.memory_space<vmem>>) attributes {dimension_semantics = [#tpu.dimension_semantics<parallel>, #tpu.dimension_semantics<arbitrary>], iteration_bounds = array<i64: 2, 1>, scalar_prefetch = 0 : i64, scratch_operands = 1 : i64, tpu.core_type = #tpu.core_type<tc>, window_params = [{transform_indices = @transform_0, window_bounds = array<i64: 8, 128>}, {pipeline_mode = #tpu.pipeline_mode<synchronous>, transform_indices = @transform_1, window_bounds = array<i64: 128, 256>}, {pipeline_mode = #tpu.pipeline_mode<synchronous>, transform_indices = @transform_2, window_bounds = array<i64: 1, 256>}, {pipeline_mode = #tpu.pipeline_mode<synchronous>, transform_indices = @transform_3, window_bounds = array<i64: 256, 128>}, {pipeline_mode = #tpu.pipeline_mode<synchronous>, transform_indices = @transform_4, window_bounds = array<i64: 1, 128>}, {transform_indices = @transform_5, window_bounds = array<i64: 8, 128>}]} {
    %c0_i32 = arith.constant 0 : i32
    %0 = arith.cmpi eq, %arg1, %c0_i32 : i32
    %1 = arith.extui %0 : i1 to i32
    %c0_i32_0 = arith.constant 0 : i32
    %2 = arith.cmpi ne, %1, %c0_i32_0 : i32
    scf.if %2 {
      %cst_30 = arith.constant 0.000000e+00 : f32
      %58 = vector.broadcast %cst_30 : f32 to vector<8x128xf32>
      %c0_31 = arith.constant 0 : index
      %c0_32 = arith.constant 0 : index
      %59 = vector.load %arg8[%c0_31, %c0_32] : memref<8x128xf32, #tpu.memory_space<vmem>>, vector<8x128xf32>
      tpu.vector_store %arg8[%c0_31, %c0_32], %58 {strides = array<i32>} : memref<8x128xf32, #tpu.memory_space<vmem>>, vector<8x128xf32>,
    } else {
    }
    %c0 = arith.constant 0 : index
    %c0_1 = arith.constant 0 : index
    %3 = vector.load %arg2[%c0, %c0_1] : memref<8x128xbf16, #tpu.memory_space<vmem>>, vector<8x128xbf16>
    %c0_2 = arith.constant 0 : index
    %c0_3 = arith.constant 0 : index
    %4 = vector.load %arg3[%c0_2, %c0_3] : memref<128x256xbf16, #tpu.memory_space<vmem>>, vector<128x256xbf16>
    %cst = arith.constant dense<0.000000e+00> : vector<8x256xf32>
    %5 = tpu.matmul %3, %4, %cst {dimension_numbers = #tpu.dot_dimension_numbers<[1], [0], [0], [1], [0, 0, 1, 1], [], []>} : vector<8x128xbf16>, vector<128x256xbf16>, vector<8x256xf32> -> vector<8x256xf32>
    %c0_4 = arith.constant 0 : index
    %c0_5 = arith.constant 0 : index
    %6 = vector.load %arg4[%c0_4, %c0_5] : memref<1x256xf32, #tpu.memory_space<vmem>>, vector<1x256xf32>
    %7 = vector.broadcast %6 : vector<1x256xf32> to vector<8x256xf32>
    %8 = arith.addf %5, %7 : vector<8x256xf32>
    %cst_6 = arith.constant 5.000000e-01 : f32
    %9 = vector.broadcast %cst_6 : f32 to vector<8x256xf32>
    %10 = arith.mulf %9, %8 : vector<8x256xf32>
    %cst_7 = arith.constant 0.707106769 : f32
    %11 = vector.broadcast %cst_7 : f32 to vector<8x256xf32>
    %12 = arith.mulf %8, %11 : vector<8x256xf32>
    %13 = math.absf %12 : vector<8x256xf32>
    %cst_8 = arith.constant 0.327591091 : f32
    %14 = vector.broadcast %cst_8 : f32 to vector<8x256xf32>
    %15 = arith.mulf %14, %13 : vector<8x256xf32>
    %cst_9 = arith.constant 1.000000e+00 : f32
    %16 = vector.broadcast %cst_9 : f32 to vector<8x256xf32>
    %17 = arith.addf %16, %15 : vector<8x256xf32>
    %cst_10 = arith.constant 1.000000e+00 : f32
    %18 = vector.broadcast %cst_10 : f32 to vector<8x256xf32>
    %19 = arith.divf %18, %17 : vector<8x256xf32>
    %cst_11 = arith.constant 1.06140542 : f32
    %20 = vector.broadcast %cst_11 : f32 to vector<8x256xf32>
    %21 = arith.mulf %20, %19 : vector<8x256xf32>
    %cst_12 = arith.constant -1.45315206 : f32
    %22 = vector.broadcast %cst_12 : f32 to vector<8x256xf32>
    %23 = arith.addf %21, %22 : vector<8x256xf32>
    %24 = arith.mulf %23, %19 : vector<8x256xf32>
    %cst_13 = arith.constant 1.42141378 : f32
    %25 = vector.broadcast %cst_13 : f32 to vector<8x256xf32>
    %26 = arith.addf %24, %25 : vector<8x256xf32>
    %27 = arith.mulf %26, %19 : vector<8x256xf32>
    %cst_14 = arith.constant -0.284496725 : f32
    %28 = vector.broadcast %cst_14 : f32 to vector<8x256xf32>
    %29 = arith.addf %27, %28 : vector<8x256xf32>
    %30 = arith.mulf %29, %19 : vector<8x256xf32>
    %cst_15 = arith.constant 0.254829586 : f32
    %31 = vector.broadcast %cst_15 : f32 to vector<8x256xf32>
    %32 = arith.addf %30, %31 : vector<8x256xf32>
    %33 = arith.mulf %32, %19 : vector<8x256xf32>
    %cst_16 = arith.constant 0.000000e+00 : f32
    %34 = vector.broadcast %cst_16 : f32 to vector<8x256xf32>
    %35 = arith.subf %34, %13 : vector<8x256xf32>
    %36 = arith.mulf %35, %13 : vector<8x256xf32>
    %37 = math.exp %36 : vector<8x256xf32>
    %38 = arith.mulf %33, %37 : vector<8x256xf32>
    %cst_17 = arith.constant 1.000000e+00 : f32
    %39 = vector.broadcast %cst_17 : f32 to vector<8x256xf32>
    %40 = arith.subf %39, %38 : vector<8x256xf32>
    %cst_18 = arith.constant 0.000000e+00 : f32
    %41 = vector.broadcast %cst_18 : f32 to vector<8x256xf32>
    %42 = arith.cmpf oge, %12, %41 : vector<8x256xf32>
    %cst_19 = arith.constant 0.000000e+00 : f32
    %43 = vector.broadcast %cst_19 : f32 to vector<8x256xf32>
    %44 = arith.subf %43, %40 : vector<8x256xf32>
    %45 = arith.select %42, %40, %44 : vector<8x256xi1>, vector<8x256xf32>
    %cst_20 = arith.constant 1.000000e+00 : f32
    %46 = vector.broadcast %cst_20 : f32 to vector<8x256xf32>
    %47 = arith.addf %46, %45 : vector<8x256xf32>
    %48 = arith.mulf %10, %47 : vector<8x256xf32>
    %c0_21 = arith.constant 0 : index
    %c0_22 = arith.constant 0 : index
    %49 = vector.load %arg8[%c0_21, %c0_22] : memref<8x128xf32, #tpu.memory_space<vmem>>, vector<8x128xf32>
    %50 = arith.truncf %48 : vector<8x256xf32> to vector<8x256xbf16>
    %c0_23 = arith.constant 0 : index
    %c0_24 = arith.constant 0 : index
    %51 = vector.load %arg5[%c0_23, %c0_24] : memref<256x128xbf16, #tpu.memory_space<vmem>>, vector<256x128xbf16>
    %cst_25 = arith.constant dense<0.000000e+00> : vector<8x128xf32>
    %52 = tpu.matmul %50, %51, %cst_25 {dimension_numbers = #tpu.dot_dimension_numbers<[1], [0], [0], [1], [0, 0, 1, 1], [], []>} : vector<8x256xbf16>, vector<256x128xbf16>, vector<8x128xf32> -> vector<8x128xf32>
    %53 = arith.addf %49, %52 : vector<8x128xf32>
    %c0_26 = arith.constant 0 : index
    %c0_27 = arith.constant 0 : index
    %54 = vector.load %arg8[%c0_26, %c0_27] : memref<8x128xf32, #tpu.memory_space<vmem>>, vector<8x128xf32>
    tpu.vector_store %arg8[%c0_26, %c0_27], %53 {strides = array<i32>} : memref<8x128xf32, #tpu.memory_space<vmem>>, vector<8x128xf32>,
    %c0_i32_28 = arith.constant 0 : i32
    %55 = arith.cmpi eq, %arg1, %c0_i32_28 : i32
    %56 = arith.extui %55 : i1 to i32
    %c0_i32_29 = arith.constant 0 : i32
    %57 = arith.cmpi ne, %56, %c0_i32_29 : i32
    scf.if %57 {
      %c0_30 = arith.constant 0 : index
      %c0_31 = arith.constant 0 : index
      %58 = vector.load %arg8[%c0_30, %c0_31] : memref<8x128xf32, #tpu.memory_space<vmem>>, vector<8x128xf32>
      %c0_32 = arith.constant 0 : index
      %c0_33 = arith.constant 0 : index
      %59 = vector.load %arg6[%c0_32, %c0_33] : memref<1x128xf32, #tpu.memory_space<vmem>>, vector<1x128xf32>
      %60 = vector.broadcast %59 : vector<1x128xf32> to vector<8x128xf32>
      %61 = arith.addf %58, %60 : vector<8x128xf32>
      %c0_34 = arith.constant 0 : index
      %c0_35 = arith.constant 0 : index
      %62 = vector.load %arg7[%c0_34, %c0_35] : memref<8x128xf32, #tpu.memory_space<vmem>>, vector<8x128xf32>
      tpu.vector_store %arg7[%c0_34, %c0_35], %61 {strides = array<i32>} : memref<8x128xf32, #tpu.memory_space<vmem>>, vector<8x128xf32>,
    } else {
    }
    return
  }
  func.func @transform_0(%arg0: i32, %arg1: i32) -> (i32, i32) {
    %c0_i32 = arith.constant 0 : i32
    %c0_i32_0 = arith.constant 0 : i32
    return %arg0, %c0_i32 : i32, i32
  }
  func.func @transform_1(%arg0: i32, %arg1: i32) -> (i32, i32) {
    %c0_i32 = arith.constant 0 : i32
    %c0_i32_0 = arith.constant 0 : i32
    return %c0_i32, %arg1 : i32, i32
  }
  func.func @transform_2(%arg0: i32, %arg1: i32) -> (i32, i32) {
    %c0_i32 = arith.constant 0 : i32
    %c0_i32_0 = arith.constant 0 : i32
    return %c0_i32, %arg1 : i32, i32
  }
  func.func @transform_3(%arg0: i32, %arg1: i32) -> (i32, i32) {
    %c0_i32 = arith.constant 0 : i32
    %c0_i32_0 = arith.constant 0 : i32
    return %arg1, %c0_i32 : i32, i32
  }
  func.func @transform_4(%arg0: i32, %arg1: i32) -> (i32, i32) {
    %c0_i32 = arith.constant 0 : i32
    %c0_i32_0 = arith.constant 0 : i32
    %c0_i32_1 = arith.constant 0 : i32
    return %c0_i32, %c0_i32_0 : i32, i32
  }
  func.func @transform_5(%arg0: i32, %arg1: i32) -> (i32, i32) {
    %c0_i32 = arith.constant 0 : i32
    %c0_i32_0 = arith.constant 0 : i32
    return %arg0, %c0_i32 : i32, i32
  }
}

</mosaic_0001>

<llo_original>
// kernel: tpu_custom_call.1
$region0: #{tpu_custom_call.1}
  #allocation0 [shape = 'u32[]', space=smem, size = 0x4, offset = 0x4, fixed_abs, tag = 'smem constant byte address 0x4 - core index']
  #allocation1 [shape = 'u32[144,128]{1,0:T(1,128)}', space=vmem, size = 0x12000, scoped, tag = 'internal scratch']
  #allocation2 [shape = 'f32[8,128]{1,0:T(8,128)}', space=vmem, size = 0x1000, scoped, tag = 'scratch operand']
  %s0 = inlined_call_operand.hbm [shape: bf16[16,128], index: 0, kind: input, shape index: {}]
  %s1 = inlined_call_operand.hbm [shape: bf16[128,256], index: 1, kind: input, shape index: {}]
  %s2 = inlined_call_operand.vmem [shape: f32[1,256], index: 2, kind: input, shape index: {}]
  %s3 = inlined_call_operand.hbm [shape: bf16[256,128], index: 3, kind: input, shape index: {}]
  %s4 = inlined_call_operand.vmem [shape: f32[1,128], index: 4, kind: input, shape index: {}]
  %s5 = inlined_call_operand.hbm [shape: f32[16,128], index: 5, kind: output, shape index: {}]
  %s6 = sld [smem:[#allocation0]]
  $region73: #{tpu_custom_call.1} parent=0
    _
  %s8 = ssub.s32 1, %s6
  %s9 = scalar_select 0, %s8, %s6
  $region1: #{tpu_custom_call.1} parent=0
    #allocation3 [shape = 'u8[4096]{0}', space=vmem, size = 0x1000, scoped, tag = 'input window, operand 0']
    #allocation4 [shape = 's32[2]{0}', space=sflag, size = 0x8, scoped, tag = 'scoped memory for tpu_custom_call.1']
    #allocation5 [shape = 's32[2]{0}', space=sflag, size = 0x8, scoped, tag = 'scoped memory for tpu_custom_call.1']
    #allocation6 [shape = 'u8[65536]{0}', space=vmem, size = 0x10000, scoped, tag = 'input window, operand 1, single buffered']
    #allocation7 [shape = 's32[1]{0}', space=sflag, size = 0x4, scoped, tag = 'scoped memory for tpu_custom_call.1']
    #allocation8 [shape = 'u8[65536]{0}', space=vmem, size = 0x10000, scoped, tag = 'input window, operand 3, single buffered']
    #allocation9 [shape = 'u8[8192]{0}', space=vmem, size = 0x2000, scoped, tag = 'output window, operand 0']
    %10 = vsyncpa [#allocation4], 0
    %s11 = scalar_lea.sflag [#allocation4], 1
    %12 = vsyncpa %s11, 0
    %13 = vsyncpa [#allocation7], 0
    %14 = vsyncpa [#allocation5], 0
    %s15 = scalar_lea.sflag [#allocation5], 1
    %16 = vsyncpa %s15, 0
    loop: start=0, step=1, limit=4
    $region2: #{tpu_custom_call.1} parent=1 // loop_pre_header
      _
    $region3: #{tpu_custom_call.1} parent=1 // loop_header
      %s18 = sphi 0, %s22
      %p19 = scmp.ge.s32.totalorder %s18, 4
      %s25 = sphi 0, %s37
      %s26 = sphi 0, %s33
      %s27 = sphi 0, %s25
      %s28 = sphi 0, %s26
      %s29 = sphi 0, %s27
      %s30 = sphi 0, %s28
      %s40 = sphi 0, %s42
      %s43 = sphi 0, %s40
      %s44 = sphi 0, %s43
      %s60 = sphi 0, %s44
      %s66 = sphi 0, %s68
      %s69 = sphi 0, %s66
      %s70 = sphi 0, %s69
      %s86 = sphi 0, %s70
      %s92 = sphi 0, %s94
      %s95 = sphi 0, %s92
      %s96 = sphi 0, %s95
      %s112 = sphi 0, %s96
      %s118 = sphi 0, %s120
      %s121 = sphi 0, %s118
      %s122 = sphi 0, %s121
      %s138 = sphi 0, %s122
      %s142 = sphi 0, %s142
      %s144 = sphi 0, %s142
      %s145 = sphi 0, %s144
      %s159 = sphi 0, %s145
      %s165 = sphi 0, %s167
      %s168 = sphi 0, %s165
      %s169 = sphi 0, %s168
      %s185 = sphi 0, %s169
    $region4: #{tpu_custom_call.1} parent=1 // loop_header_branch
      %21 = sbr.rel (%p19) target = $region8
    $region5: #{tpu_custom_call.1} parent=1 // loop_body
      %s23 = ssub.s32 %s18, 1
      %s24 = ssub.s32 %s18, 2
      %s31 = sadd.s32 1, %s26
      %p32 = scmp.ge.s32.totalorder %s31, 1
      %s33 = scalar_select %p32, 0, %s31
      %s34 = sadd.s32 1, %s25
      %s35 = scalar_select %p32, %s34, %s25
      %p36 = scmp.ge.s32.totalorder %s35, 2
      %s37 = scalar_select %p36, 0, %s35
      %s38 = ssub.s32 %s25, %s37
      %p39 = scmp.eq.s32.totalorder %s38, 0
      %s41 = sadd.s32 %s40, 1
      %s42 = scalar_select %p39, %s40, %s41
      %p45 = pneg %p39
      %p46 = scmp.eq.s32.totalorder %s18, 1
      %p47 = por %p45, %p46
      %p48 = scmp.ne.s32.totalorder %s40, %s43
      %p49 = scmp.eq.s32.totalorder %s18, 0
      %p50 = por %p48, %p49
      %p51 = scmp.ne.s32.totalorder %s40, %s43
      %p52 = scmp.eq.s32.totalorder %s23, 1
      %p53 = por %p51, %p52
      %p54 = scmp.ne.s32.totalorder %s43, %s44
      %p55 = scmp.eq.s32.totalorder %s23, 0
      %p56 = por %p54, %p55
      %p57 = scmp.ne.s32.totalorder %s43, %s44
      %p58 = scmp.eq.s32.totalorder %s24, 1
      %p59 = por %p57, %p58
      %p61 = scmp.ne.s32.totalorder %s44, %s60
      %p62 = scmp.eq.s32.totalorder %s24, 0
      %p63 = por %p61, %p62
      %s64 = ssub.s32 %s26, %s33
      %p65 = scmp.eq.s32.totalorder %s64, 0
      %s67 = sadd.s32 %s66, 1
      %s68 = scalar_select %p65, %s66, %s67
      %p71 = pneg %p65
      %p72 = scmp.eq.s32.totalorder %s18, 1
      %p73 = por %p71, %p72
      %p74 = scmp.ne.s32.totalorder %s66, %s69
      %p75 = scmp.eq.s32.totalorder %s18, 0
      %p76 = por %p74, %p75
      %p77 = scmp.ne.s32.totalorder %s66, %s69
      %p78 = scmp.eq.s32.totalorder %s23, 1
      %p79 = por %p77, %p78
      %p80 = scmp.ne.s32.totalorder %s69, %s70
      %p81 = scmp.eq.s32.totalorder %s23, 0
      %p82 = por %p80, %p81
      %p83 = scmp.ne.s32.totalorder %s69, %s70
      %p84 = scmp.eq.s32.totalorder %s24, 1
      %p85 = por %p83, %p84
      %p87 = scmp.ne.s32.totalorder %s70, %s86
      %p88 = scmp.eq.s32.totalorder %s24, 0
      %p89 = por %p87, %p88
      %s90 = ssub.s32 %s26, %s33
      %p91 = scmp.eq.s32.totalorder %s90, 0
      %s93 = sadd.s32 %s92, 1
      %s94 = scalar_select %p91, %s92, %s93
      %p97 = pneg %p91
      %p98 = scmp.eq.s32.totalorder %s18, 1
      %p99 = por %p97, %p98
      %p100 = scmp.ne.s32.totalorder %s92, %s95
      %p101 = scmp.eq.s32.totalorder %s18, 0
      %p102 = por %p100, %p101
      %p103 = scmp.ne.s32.totalorder %s92, %s95
      %p104 = scmp.eq.s32.totalorder %s23, 1
      %p105 = por %p103, %p104
      %p106 = scmp.ne.s32.totalorder %s95, %s96
      %p107 = scmp.eq.s32.totalorder %s23, 0
      %p108 = por %p106, %p107
      %p109 = scmp.ne.s32.totalorder %s95, %s96
      %p110 = scmp.eq.s32.totalorder %s24, 1
      %p111 = por %p109, %p110
      %p113 = scmp.ne.s32.totalorder %s96, %s112
      %p114 = scmp.eq.s32.totalorder %s24, 0
      %p115 = por %p113, %p114
      %s116 = ssub.s32 %s26, %s33
      %p117 = scmp.eq.s32.totalorder %s116, 0
      %s119 = sadd.s32 %s118, 1
      %s120 = scalar_select %p117, %s118, %s119
      %p123 = pneg %p117
      %p124 = scmp.eq.s32.totalorder %s18, 1
      %p125 = por %p123, %p124
      %p126 = scmp.ne.s32.totalorder %s118, %s121
      %p127 = scmp.eq.s32.totalorder %s18, 0
      %p128 = por %p126, %p127
      %p129 = scmp.ne.s32.totalorder %s118, %s121
      %p130 = scmp.eq.s32.totalorder %s23, 1
      %p131 = por %p129, %p130
      %p132 = scmp.ne.s32.totalorder %s121, %s122
      %p133 = scmp.eq.s32.totalorder %s23, 0
      %p134 = por %p132, %p133
      %p135 = scmp.ne.s32.totalorder %s121, %s122
      %p136 = scmp.eq.s32.totalorder %s24, 1
      %p137 = por %p135, %p136
      %p139 = scmp.ne.s32.totalorder %s122, %s138
      %p140 = scmp.eq.s32.totalorder %s24, 0
      %p141 = por %p139, %p140
      %s143 = sadd.s32 %s142, 1
      %p146 = scmp.eq.s32.totalorder %s18, 1
      %p147 = scmp.ne.s32.totalorder %s142, %s144
      %p148 = scmp.eq.s32.totalorder %s18, 0
      %p149 = por %p147, %p148
      %p150 = scmp.ne.s32.totalorder %s142, %s144
      %p151 = scmp.eq.s32.totalorder %s23, 1
      %p152 = por %p150, %p151
      %p153 = scmp.ne.s32.totalorder %s144, %s145
      %p154 = scmp.eq.s32.totalorder %s23, 0
      %p155 = por %p153, %p154
      %p156 = scmp.ne.s32.totalorder %s144, %s145
      %p157 = scmp.eq.s32.totalorder %s24, 1
      %p158 = por %p156, %p157
      %p160 = scmp.ne.s32.totalorder %s145, %s159
      %p161 = scmp.eq.s32.totalorder %s24, 0
      %p162 = por %p160, %p161
      %s163 = ssub.s32 %s25, %s37
      %p164 = scmp.eq.s32.totalorder %s163, 0
      %s166 = sadd.s32 %s165, 1
      %s167 = scalar_select %p164, %s165, %s166
      %p170 = pneg %p164
      %p171 = scmp.eq.s32.totalorder %s18, 1
      %p172 = por %p170, %p171
      %p173 = scmp.ne.s32.totalorder %s165, %s168
      %p174 = scmp.eq.s32.totalorder %s18, 0
      %p175 = por %p173, %p174
      %p176 = scmp.ne.s32.totalorder %s165, %s168
      %p177 = scmp.eq.s32.totalorder %s23, 1
      %p178 = por %p176, %p177
      %p179 = scmp.ne.s32.totalorder %s168, %s169
      %p180 = scmp.eq.s32.totalorder %s23, 0
      %p181 = por %p179, %p180
      %p182 = scmp.ne.s32.totalorder %s168, %s169
      %p183 = scmp.eq.s32.totalorder %s24, 1
      %p184 = por %p182, %p183
      %p186 = scmp.ne.s32.totalorder %s169, %s185
      %p187 = scmp.eq.s32.totalorder %s24, 0
      %p188 = por %p186, %p187
      %p189 = scmp.le.s32.totalorder 1, %s18
      %p190 = scmp.lt.s32.totalorder %s18, 3
      %p191 = pnand %p189, %p190
      %p192 = pneg %p191
      // Predicated region
      $region9: #{tpu_custom_call.1} parent=5 // pred_check
        _
      $region10: #{tpu_custom_call.1} parent=5 // pred_check_branch
        %194 = sbr.rel (%p191) target = $region12
      $region11: #{tpu_custom_call.1} parent=5 // pred_region
        %s195 = ssub.s32 %s18, 1
        // Predicated region
        $region13: #{tpu_custom_call.1} parent=11 // pred_check
          %p196 = pneg %p82
        $region14: #{tpu_custom_call.1} parent=11 // pred_check_branch
          %198 = sbr.rel (%p196) target = $region16
        $region15: #{tpu_custom_call.1} parent=11 // pred_region
          %s199 = smul.u32 2, %s28
          %s201 = ssub.s32 2048, 2048
          %202 = vsyncadd [#allocation7], %s201
          %s203 = smul.addr %s199, 64
          %s204 = scalar_lea.hbm %s1, %s203
          %s205 = sshll.u32 [#allocation6], 4
          %s206 = int_to_ptr.vmem [resolvable:$true] %s205
          %211 = dma.hbm_to_vmem [thread:$0]  %s204, 2048, %s206, [#allocation7], 128, 128, 8
        $region16: #{tpu_custom_call.1} parent=11 // pred_fallthru
          _
        // Predicated region
        $region17: #{tpu_custom_call.1} parent=11 // pred_check
          %p212 = pneg %p108
        $region18: #{tpu_custom_call.1} parent=11 // pred_check_branch
          %214 = sbr.rel (%p212) target = $region20
        $region19: #{tpu_custom_call.1} parent=11 // pred_region
          %s215 = smul.u32 2, %s28
          %p216 = scmp.lt.s32.totalorder %s215, 1
          %s217 = scalar_select %p216, %s215, 1
          %s218 = scalar_lea.vmem %s2, %s217
          %s219 = smul.u32 2, %s28
        $region20: #{tpu_custom_call.1} parent=11 // pred_fallthru
          _
        // Predicated region
        $region21: #{tpu_custom_call.1} parent=11 // pred_check
          %p220 = pneg %p134
        $region22: #{tpu_custom_call.1} parent=11 // pred_check_branch
          %222 = sbr.rel (%p220) target = $region24
        $region23: #{tpu_custom_call.1} parent=11 // pred_region
          %s223 = smul.u32 32, %s28
          %s225 = ssub.s32 2048, 2048
          %226 = vsyncadd [#allocation7], %s225
          %s227 = smul.addr %s223, 64
          %s228 = scalar_lea.hbm %s3, %s227
          %s229 = sshll.u32 [#allocation8], 4
          %s230 = int_to_ptr.vmem [resolvable:$true] %s229
          %235 = dma.hbm_to_vmem [thread:$0]  %s228, 2048, %s230, [#allocation7], 64, 64, 4
        $region24: #{tpu_custom_call.1} parent=11 // pred_fallthru
          _
        // Predicated region
        $region25: #{tpu_custom_call.1} parent=11 // pred_check
          %p236 = pneg %p155
        $region26: #{tpu_custom_call.1} parent=11 // pred_check_branch
          %238 = sbr.rel (%p236) target = $region28
        $region27: #{tpu_custom_call.1} parent=11 // pred_region
          _
        $region28: #{tpu_custom_call.1} parent=11 // pred_fallthru
          _
      $region12: #{tpu_custom_call.1} parent=5 // pred_fallthru
        _
      %p239 = scmp.lt.s32.totalorder %s18, 2
      // Predicated region
      $region29: #{tpu_custom_call.1} parent=5 // pred_check
        %p240 = pneg %p239
      $region30: #{tpu_custom_call.1} parent=5 // pred_check_branch
        %242 = sbr.rel (%p240) target = $region32
      $region31: #{tpu_custom_call.1} parent=5 // pred_region
        // Predicated region
        $region33: #{tpu_custom_call.1} parent=31 // pred_check
          %p243 = pneg %p50
        $region34: #{tpu_custom_call.1} parent=31 // pred_check_branch
          %245 = sbr.rel (%p243) target = $region36
        $region35: #{tpu_custom_call.1} parent=31 // pred_region
          %s246 = sand.u32 %s40, 1
          %s247 = scalar_lea.sflag [#allocation4], %s246
          %s248 = sand.u32 %s40, 1
          %s249 = smul.addr %s248, 4
          %s250 = scalar_lea.vmem [#allocation3], %s249
          %s252 = ssub.s32 64, 64
          %253 = vsyncadd %s247, %s252
          %s254 = smul.addr %s25, 64
          %s255 = scalar_lea.hbm %s0, %s254
          %s257 = sshll.u32 %s250, 4
          %s258 = int_to_ptr.vmem [resolvable:$true] %s257
          %260 = dma.hbm_to_vmem [thread:$0]  %s255, 64, %s258, %s247
        $region36: #{tpu_custom_call.1} parent=31 // pred_fallthru
          _
      $region32: #{tpu_custom_call.1} parent=5 // pred_fallthru
        _
      %p261 = scmp.le.s32.totalorder 1, %s18
      %p262 = scmp.lt.s32.totalorder %s18, 3
      %p263 = pnand %p261, %p262
      %p264 = pneg %p263
      // Predicated region
      $region37: #{tpu_custom_call.1} parent=5 // pred_check
        _
      $region38: #{tpu_custom_call.1} parent=5 // pred_check_branch
        %266 = sbr.rel (%p263) target = $region40
      $region39: #{tpu_custom_call.1} parent=5 // pred_region
        %s267 = ssub.s32 %s18, 1
        %s268 = sand.u32 %s43, 1
        %s269 = scalar_lea.sflag [#allocation4], %s268
        %s270 = sand.u32 %s43, 1
        %s271 = smul.addr %s270, 4
        %s272 = scalar_lea.vmem [#allocation3], %s271
        // Predicated region
        $region41: #{tpu_custom_call.1} parent=39 // pred_check
          %p273 = pneg %p56
        $region42: #{tpu_custom_call.1} parent=39 // pred_check_branch
          %275 = sbr.rel (%p273) target = $region44
        $region43: #{tpu_custom_call.1} parent=39 // pred_region
          %276 = dma.done %s269, 64
        $region44: #{tpu_custom_call.1} parent=39 // pred_fallthru
          _
        // Predicated region
        $region45: #{tpu_custom_call.1} parent=39 // pred_check
          %p277 = pneg %p82
        $region46: #{tpu_custom_call.1} parent=39 // pred_check_branch
          %279 = sbr.rel (%p277) target = $region48
        $region47: #{tpu_custom_call.1} parent=39 // pred_region
          %280 = dma.done [#allocation7], 2048
        $region48: #{tpu_custom_call.1} parent=39 // pred_fallthru
          _
        // Predicated region
        $region49: #{tpu_custom_call.1} parent=39 // pred_check
          %p281 = pneg %p134
        $region50: #{tpu_custom_call.1} parent=39 // pred_check_branch
          %283 = sbr.rel (%p281) target = $region52
        $region51: #{tpu_custom_call.1} parent=39 // pred_region
          %284 = dma.done [#allocation7], 2048
        $region52: #{tpu_custom_call.1} parent=39 // pred_fallthru
          _
        %s285 = sand.u32 %s43, 1
        %s286 = scalar_lea.sflag [#allocation4], %s285
        %s287 = sand.u32 %s43, 1
        %s288 = smul.addr %s287, 4
        %s289 = scalar_lea.vmem [#allocation3], %s288
        %p290 = pneg %p56
        %p291 = pneg %p53
        %p292 = pneg %p82
        %p293 = pneg %p79
        %s294 = smul.u32 2, %s28
        %p295 = scmp.lt.s32.totalorder %s294, 1
        %s296 = scalar_select %p295, %s294, 1
        %s297 = scalar_lea.vmem %s2, %s296
        %p298 = pneg %p108
        %p299 = pneg %p105
        %p300 = pneg %p134
        %p301 = pneg %p131
        %p302 = pneg %p155
        %p303 = pneg %p152
        %p304 = pneg %p181
        %p305 = pneg %p178
        %s306 = sand.u32 %s168, 1
        %s307 = scalar_lea.sflag [#allocation5], %s306
        %s308 = sand.u32 %s168, 1
        %s309 = smul.addr %s308, 8
        %s310 = scalar_lea.vmem [#allocation9], %s309
        %s311 = smul.u32 2, %s28
        %s312 = smul.u32 2, %s28
        %p313 = scmp.lt.s32.totalorder %s312, 1
        %s314 = scalar_select %p313, %s312, 1
        %s315 = scalar_lea.vmem %s2, %s314
        %s316 = smul.u32 2, %s28
        %s317 = smul.u32 32, %s28
        %p319 = scmp.eq.s32.totalorder %s28, 0
        // Predicated region
        $region53: #{tpu_custom_call.1} parent=39 // pred_check
          %p320 = pneg %p319
        $region54: #{tpu_custom_call.1} parent=39 // pred_check_branch
          %322 = sbr.rel (%p320) target = $region56
        $region55: #{tpu_custom_call.1} parent=39 // pred_region
          %323 = vst [vmem:[#allocation2] sm:$0xff] 0.0
        $region56: #{tpu_custom_call.1} parent=39 // pred_fallthru
          _
        %v324 = vld [vmem:[%s272] sm:$0xf]
        %v325 = vld [vmem:[#allocation6] sm:$0xff]
        %v326 = vld [vmem:[#allocation6 + $0x8] sm:$0xff]
        %v327 = vld [vmem:[#allocation6 + $0x10] sm:$0xff]
        %v328 = vld [vmem:[#allocation6 + $0x18] sm:$0xff]
        %v329 = vld [vmem:[#allocation6 + $0x20] sm:$0xff]
        %v330 = vld [vmem:[#allocation6 + $0x28] sm:$0xff]
        %v331 = vld [vmem:[#allocation6 + $0x30] sm:$0xff]
        %v332 = vld [vmem:[#allocation6 + $0x38] sm:$0xff]
        %v333 = vld [vmem:[#allocation6 + $0x40] sm:$0xff]
        %v334 = vld [vmem:[#allocation6 + $0x48] sm:$0xff]
        %v335 = vld [vmem:[#allocation6 + $0x50] sm:$0xff]
        %v336 = vld [vmem:[#allocation6 + $0x58] sm:$0xff]
        %v337 = vld [vmem:[#allocation6 + $0x60] sm:$0xff]
        %v338 = vld [vmem:[#allocation6 + $0x68] sm:$0xff]
        %v339 = vld [vmem:[#allocation6 + $0x70] sm:$0xff]
        %v340 = vld [vmem:[#allocation6 + $0x78] sm:$0xff]
        %v341 = vld [vmem:[%s315] sm:$0x3]
        %v343 = vlaneseq
        %v344 = vshrl.u32 %v343, 7
        %v345 = vsub.s32 0, %v344
        %v346 = vrot.slane %v341, %v345
        %v347 = vlaneseq
        %v348 = vshrl.u32 %v347, 7
        %v349 = vsub.s32 1, %v348
        %v350 = vrot.slane %v341, %v349
        %v369 = vunpack.c.l.b16 %v325
        %v370 = vunpack.c.h.b16 %v325
        %v371 = vunpack.c.l.b16 %v326
        %v372 = vunpack.c.h.b16 %v326
        %v373 = vunpack.c.l.b16 %v327
        %v374 = vunpack.c.h.b16 %v327
        %v375 = vunpack.c.l.b16 %v328
        %v376 = vunpack.c.h.b16 %v328
        %v377 = vunpack.c.l.b16 %v329
        %v378 = vunpack.c.h.b16 %v329
        %v379 = vunpack.c.l.b16 %v330
        %v380 = vunpack.c.h.b16 %v330
        %v381 = vunpack.c.l.b16 %v331
        %v382 = vunpack.c.h.b16 %v331
        %v383 = vunpack.c.l.b16 %v332
        %v384 = vunpack.c.h.b16 %v332
        %v385 = vunpack.c.l.b16 %v333
        %v386 = vunpack.c.h.b16 %v333
        %v387 = vunpack.c.l.b16 %v334
        %v388 = vunpack.c.h.b16 %v334
        %v389 = vunpack.c.l.b16 %v335
        %v390 = vunpack.c.h.b16 %v335
        %v391 = vunpack.c.l.b16 %v336
        %v392 = vunpack.c.h.b16 %v336
        %v393 = vunpack.c.l.b16 %v337
        %v394 = vunpack.c.h.b16 %v337
        %v395 = vunpack.c.l.b16 %v338
        %v396 = vunpack.c.h.b16 %v338
        %v397 = vunpack.c.l.b16 %v339
        %v398 = vunpack.c.h.b16 %v339
        %v399 = vunpack.c.l.b16 %v340
        %v400 = vunpack.c.h.b16 %v340
        %v401 = vpack.c.b16 %v371, %v369
        %v402 = vpack.c.b16 %v372, %v370
        %v403 = vpack.c.b16 %v375, %v373
        %v404 = vpack.c.b16 %v376, %v374
        %v405 = vpack.c.b16 %v379, %v377
        %v406 = vpack.c.b16 %v380, %v378
        %v407 = vpack.c.b16 %v383, %v381
        %v408 = vpack.c.b16 %v384, %v382
        %v409 = vpack.c.b16 %v387, %v385
        %v410 = vpack.c.b16 %v388, %v386
        %v411 = vpack.c.b16 %v391, %v389
        %v412 = vpack.c.b16 %v392, %v390
        %v413 = vpack.c.b16 %v395, %v393
        %v414 = vpack.c.b16 %v396, %v394
        %v415 = vpack.c.b16 %v399, %v397
        %v416 = vpack.c.b16 %v400, %v398
        %433 = vmatprep.subr.bf16.mxu0 %v402
        %434 = vmatpush1.bf16.msra.mxu0 %v401
        %435 = vmatprep.subr.bf16.mxu0 %v404
        %436 = vmatpush1.bf16.msra.mxu0 %v403
        %437 = vmatprep.subr.bf16.mxu0 %v406
        %438 = vmatpush1.bf16.msra.mxu0 %v405
        %439 = vmatprep.subr.bf16.mxu0 %v408
        %440 = vmatpush1.bf16.msra.mxu0 %v407
        %441 = vmatprep.subr.bf16.mxu0 %v410
        %442 = vmatpush1.bf16.msra.mxu0 %v409
        %443 = vmatprep.subr.bf16.mxu0 %v412
        %444 = vmatpush1.bf16.msra.mxu0 %v411
        %445 = vmatprep.subr.bf16.mxu0 %v414
        %446 = vmatpush1.bf16.msra.mxu0 %v413
        %447 = vmatprep.subr.bf16.mxu0 %v416
        %448 = vmatpush1.bf16.msra.mxu0 %v415
        %449 = vmatprep.subr.bf16.mxu0 0
        %450 = vmatpush1.bf16.msra.mxu0 0
        %451 = vmatprep.subr.bf16.mxu0 0
        %452 = vmatpush1.bf16.msra.mxu0 0
        %453 = vmatprep.subr.bf16.mxu0 0
        %454 = vmatpush1.bf16.msra.mxu0 0
        %455 = vmatprep.subr.bf16.mxu0 0
        %456 = vmatpush1.bf16.msra.mxu0 0
        %457 = vmatprep.subr.bf16.mxu0 0
        %458 = vmatpush1.bf16.msra.mxu0 0
        %459 = vmatprep.subr.bf16.mxu0 0
        %460 = vmatpush1.bf16.msra.mxu0 0
        %461 = vmatprep.subr.bf16.mxu0 0
        %462 = vmatpush1.bf16.msra.mxu0 0
        %463 = vmatprep.subr.bf16.mxu0 0
        %464 = vmatpush1.bf16.msra.mxu0 0
        %465 = vmatprep.mubr.bf16.mxu0 0
        %466 = vmatmul.mubr.bf16.gmra.mrb[0].mxu0 %v324
        %v467 = vpop.f32.mrb[0].mxu0
        %v468 = vadd.f32 %v346, %v467
        %v469 = vpop.f32.mrb[0].mxu0
        %v470 = vadd.f32 %v350, %v469
        %v471 = vpop.f32.mrb[0].mxu0
        %v472 = vpop.f32.mrb[0].mxu0
        %473 = vdwg.mxu0
        %v474 = vmul.f32 %v468, 0.5
        %v475 = vmul.f32 %v470, 0.5
        %v476 = vmul.f32 %v468, 0.70710677
        %v477 = vmul.f32 %v470, 0.70710677
        %v478 = vand.u32 2147483647, %v476
        %v479 = vand.u32 2147483647, %v477
        %v480 = vmul.f32 %v478, 0.3275911
        %v481 = vmul.f32 %v479, 0.3275911
        %v482 = vadd.f32 %v480, 1.0
        %v483 = vadd.f32 %v481, 1.0
        %v484 = vrcp.pop %v482
        %v485 = vmul.f32 1.0, %v484
        %v486 = vrcp.pop %v483
        %v487 = vmul.f32 1.0, %v486
        %v488 = vmul.f32 %v485, 1.0614054
        %v489 = vmul.f32 %v487, 1.0614054
        %v490 = vadd.f32 %v488, -1.4531521
        %v491 = vadd.f32 %v489, -1.4531521
        %v492 = vmul.f32 %v490, %v485
        %v493 = vmul.f32 %v491, %v487
        %v494 = vadd.f32 %v492, 1.4214138
        %v495 = vadd.f32 %v493, 1.4214138
        %v496 = vmul.f32 %v494, %v485
        %v497 = vmul.f32 %v495, %v487
        %v498 = vadd.f32 %v496, -0.28449672
        %v499 = vadd.f32 %v497, -0.28449672
        %v500 = vmul.f32 %v498, %v485
        %v501 = vmul.f32 %v499, %v487
        %v502 = vadd.f32 %v500, 0.2548296
        %v503 = vadd.f32 %v501, 0.2548296
        %v504 = vmul.f32 %v502, %v485
        %v505 = vmul.f32 %v503, %v487
        %v506 = vsub.f32 0.0, %v478
        %v507 = vsub.f32 0.0, %v479
        %v508 = vmul.f32 %v506, %v478
        %v509 = vmul.f32 %v507, %v479
        %v510 = vmul.f32 %v508, 1.442695
        %v511 = vpow.pop %v510
        %v512 = vmul.f32 %v509, 1.442695
        %v513 = vpow.pop %v512
        %v514 = vmul.f32 %v504, %v511
        %v515 = vmul.f32 %v505, %v513
        %v516 = vsub.f32 1.0, %v514
        %v517 = vsub.f32 1.0, %v515
        %vm518 = vcmp.ge.f32.partialorder %v476, 0.0
        %vm519 = vcmp.ge.f32.partialorder %v477, 0.0
        %v520 = vsub.f32 0.0, %v516
        %v521 = vsub.f32 0.0, %v517
        %v522 = vsel %vm518, %v516, %v520
        %v523 = vsel %vm519, %v517, %v521
        %v524 = vadd.f32 %v522, 1.0
        %v525 = vadd.f32 %v523, 1.0
        %v526 = vmul.f32 %v474, %v524
        %v527 = vmul.f32 %v475, %v525
        %v528 = vld [vmem:[#allocation2] sm:$0xff]
        %v529 = vpack.c.bf16 %v526, %v526
        %v530 = vpack.c.bf16 %v527, %v527
        %v531 = vld [vmem:[#allocation8] sm:$0xf]
        %v532 = vld [vmem:[#allocation8 + $0x4] sm:$0xf]
        %v533 = vld [vmem:[#allocation8 + $0x8] sm:$0xf]
        %v534 = vld [vmem:[#allocation8 + $0xc] sm:$0xf]
        %v535 = vld [vmem:[#allocation8 + $0x10] sm:$0xf]
        %v536 = vld [vmem:[#allocation8 + $0x14] sm:$0xf]
        %v537 = vld [vmem:[#allocation8 + $0x18] sm:$0xf]
        %v538 = vld [vmem:[#allocation8 + $0x1c] sm:$0xf]
        %v539 = vld [vmem:[#allocation8 + $0x20] sm:$0xf]
        %v540 = vld [vmem:[#allocation8 + $0x24] sm:$0xf]
        %v541 = vld [vmem:[#allocation8 + $0x28] sm:$0xf]
        %v542 = vld [vmem:[#allocation8 + $0x2c] sm:$0xf]
        %v543 = vld [vmem:[#allocation8 + $0x30] sm:$0xf]
        %v544 = vld [vmem:[#allocation8 + $0x34] sm:$0xf]
        %v545 = vld [vmem:[#allocation8 + $0x38] sm:$0xf]
        %v546 = vld [vmem:[#allocation8 + $0x3c] sm:$0xf]
        %v547 = vld [vmem:[#allocation8 + $0x40] sm:$0xf]
        %v548 = vld [vmem:[#allocation8 + $0x44] sm:$0xf]
        %v549 = vld [vmem:[#allocation8 + $0x48] sm:$0xf]
        %v550 = vld [vmem:[#allocation8 + $0x4c] sm:$0xf]
        %v551 = vld [vmem:[#allocation8 + $0x50] sm:$0xf]
        %v552 = vld [vmem:[#allocation8 + $0x54] sm:$0xf]
        %v553 = vld [vmem:[#allocation8 + $0x58] sm:$0xf]
        %v554 = vld [vmem:[#allocation8 + $0x5c] sm:$0xf]
        %v555 = vld [vmem:[#allocation8 + $0x60] sm:$0xf]
        %v556 = vld [vmem:[#allocation8 + $0x64] sm:$0xf]
        %v557 = vld [vmem:[#allocation8 + $0x68] sm:$0xf]
        %v558 = vld [vmem:[#allocation8 + $0x6c] sm:$0xf]
        %v559 = vld [vmem:[#allocation8 + $0x70] sm:$0xf]
        %v560 = vld [vmem:[#allocation8 + $0x74] sm:$0xf]
        %v561 = vld [vmem:[#allocation8 + $0x78] sm:$0xf]
        %v562 = vld [vmem:[#allocation8 + $0x7c] sm:$0xf]
        %v595 = vunpack.c.l.b16 %v531
        %v596 = vunpack.c.l.b16 %v532
        %v597 = vunpack.c.l.b16 %v533
        %v598 = vunpack.c.l.b16 %v534
        %v599 = vunpack.c.l.b16 %v535
        %v600 = vunpack.c.l.b16 %v536
        %v601 = vunpack.c.l.b16 %v537
        %v602 = vunpack.c.l.b16 %v538
        %v603 = vunpack.c.l.b16 %v539
        %v604 = vunpack.c.l.b16 %v540
        %v605 = vunpack.c.l.b16 %v541
        %v606 = vunpack.c.l.b16 %v542
        %v607 = vunpack.c.l.b16 %v543
        %v608 = vunpack.c.l.b16 %v544
        %v609 = vunpack.c.l.b16 %v545
        %v610 = vunpack.c.l.b16 %v546
        %v611 = vunpack.c.l.b16 %v547
        %v612 = vunpack.c.l.b16 %v548
        %v613 = vunpack.c.l.b16 %v549
        %v614 = vunpack.c.l.b16 %v550
        %v615 = vunpack.c.l.b16 %v551
        %v616 = vunpack.c.l.b16 %v552
        %v617 = vunpack.c.l.b16 %v553
        %v618 = vunpack.c.l.b16 %v554
        %v619 = vunpack.c.l.b16 %v555
        %v620 = vunpack.c.l.b16 %v556
        %v621 = vunpack.c.l.b16 %v557
        %v622 = vunpack.c.l.b16 %v558
        %v623 = vunpack.c.l.b16 %v559
        %v624 = vunpack.c.l.b16 %v560
        %v625 = vunpack.c.l.b16 %v561
        %v626 = vunpack.c.l.b16 %v562
        %v627 = vpack.c.b16 %v596, %v595
        %v628 = vpack.c.b16 %v598, %v597
        %v629 = vpack.c.b16 %v600, %v599
        %v630 = vpack.c.b16 %v602, %v601
        %v631 = vpack.c.b16 %v604, %v603
        %v632 = vpack.c.b16 %v606, %v605
        %v633 = vpack.c.b16 %v608, %v607
        %v634 = vpack.c.b16 %v610, %v609
        %v635 = vpack.c.b16 %v612, %v611
        %v636 = vpack.c.b16 %v614, %v613
        %v637 = vpack.c.b16 %v616, %v615
        %v638 = vpack.c.b16 %v618, %v617
        %v639 = vpack.c.b16 %v620, %v619
        %v640 = vpack.c.b16 %v622, %v621
        %v641 = vpack.c.b16 %v624, %v623
        %v642 = vpack.c.b16 %v626, %v625
        %659 = vmatprep.subr.bf16.mxu0 0
        %660 = vmatpush1.bf16.msra.mxu0 %v627
        %661 = vmatprep.subr.bf16.mxu0 0
        %662 = vmatpush1.bf16.msra.mxu0 %v628
        %663 = vmatprep.subr.bf16.mxu0 0
        %664 = vmatpush1.bf16.msra.mxu0 %v629
        %665 = vmatprep.subr.bf16.mxu0 0
        %666 = vmatpush1.bf16.msra.mxu0 %v630
        %667 = vmatprep.subr.bf16.mxu0 0
        %668 = vmatpush1.bf16.msra.mxu0 %v631
        %669 = vmatprep.subr.bf16.mxu0 0
        %670 = vmatpush1.bf16.msra.mxu0 %v632
        %671 = vmatprep.subr.bf16.mxu0 0
        %672 = vmatpush1.bf16.msra.mxu0 %v633
        %673 = vmatprep.subr.bf16.mxu0 0
        %674 = vmatpush1.bf16.msra.mxu0 %v634
        %675 = vmatprep.subr.bf16.mxu0 0
        %676 = vmatpush1.bf16.msra.mxu0 %v635
        %677 = vmatprep.subr.bf16.mxu0 0
        %678 = vmatpush1.bf16.msra.mxu0 %v636
        %679 = vmatprep.subr.bf16.mxu0 0
        %680 = vmatpush1.bf16.msra.mxu0 %v637
        %681 = vmatprep.subr.bf16.mxu0 0
        %682 = vmatpush1.bf16.msra.mxu0 %v638
        %683 = vmatprep.subr.bf16.mxu0 0
        %684 = vmatpush1.bf16.msra.mxu0 %v639
        %685 = vmatprep.subr.bf16.mxu0 0
        %686 = vmatpush1.bf16.msra.mxu0 %v640
        %687 = vmatprep.subr.bf16.mxu0 0
        %688 = vmatpush1.bf16.msra.mxu0 %v641
        %689 = vmatprep.subr.bf16.mxu0 0
        %690 = vmatpush1.bf16.msra.mxu0 %v642
        %691 = vmatprep.mubr.bf16.mxu0 %v530
        %692 = vmatmul.mubr.bf16.gmra.mrb[0].mxu0 %v529
        %v693 = vpop.f32.mrb[0].mxu0
        %v694 = vadd.f32 0.0, %v693
        %v695 = vpop.f32.mrb[0].mxu0
        %v696 = vpop.f32.mrb[0].mxu0
        %v697 = vpop.f32.mrb[0].mxu0
        %698 = vdwg.mxu0
        %v699 = vadd.f32 %v528, %v694
        %700 = vst [vmem:[#allocation2] sm:$0xff] %v699
        // Predicated region
        $region57: #{tpu_custom_call.1} parent=39 // pred_check
          %p701 = pneg %p319
        $region58: #{tpu_custom_call.1} parent=39 // pred_check_branch
          %703 = sbr.rel (%p701) target = $region60
        $region59: #{tpu_custom_call.1} parent=39 // pred_region
          %v704 = vld [vmem:[#allocation2] sm:$0xff]
          %v705 = vld [vmem:[%s4] sm:$0x1]
          %v707 = vlaneseq
          %v708 = vshrl.u32 %v707, 7
          %v709 = vsub.s32 0, %v708
          %v710 = vrot.slane %v705, %v709
          %v712 = vadd.f32 %v704, %v710
          %713 = vst [vmem:[%s310] sm:$0xff] %v712
        $region60: #{tpu_custom_call.1} parent=39 // pred_fallthru
          _
        %s714 = sand.u32 %s168, 1
        %s715 = scalar_lea.sflag [#allocation5], %s714
        %s716 = sand.u32 %s168, 1
        %s717 = smul.addr %s716, 8
        %s718 = scalar_lea.vmem [#allocation9], %s717
        // Predicated region
        $region61: #{tpu_custom_call.1} parent=39 // pred_check
          %p719 = pneg %p178
        $region62: #{tpu_custom_call.1} parent=39 // pred_check_branch
          %721 = sbr.rel (%p719) target = $region64
        $region63: #{tpu_custom_call.1} parent=39 // pred_region
          %s723 = ssub.s32 128, 128
          %724 = vsyncadd %s715, %s723
          %s725 = smul.addr %s27, 128
          %s726 = scalar_lea.hbm %s5, %s725
          %s728 = sshll.u32 %s718, 4
          %s729 = int_to_ptr.vmem [resolvable:$true] %s728
          %731 = dma.vmem_to_hbm [thread:$0]  %s729, 128, %s726, %s715
        $region64: #{tpu_custom_call.1} parent=39 // pred_fallthru
          _
      $region40: #{tpu_custom_call.1} parent=5 // pred_fallthru
        _
      %p732 = scmp.le.s32.totalorder 2, %s18
      // Predicated region
      $region65: #{tpu_custom_call.1} parent=5 // pred_check
        %p733 = pneg %p732
      $region66: #{tpu_custom_call.1} parent=5 // pred_check_branch
        %735 = sbr.rel (%p733) target = $region68
      $region67: #{tpu_custom_call.1} parent=5 // pred_region
        %s736 = ssub.s32 %s18, 2
        // Predicated region
        $region69: #{tpu_custom_call.1} parent=67 // pred_check
          %p737 = pneg %p184
        $region70: #{tpu_custom_call.1} parent=67 // pred_check_branch
          %739 = sbr.rel (%p737) target = $region72
        $region71: #{tpu_custom_call.1} parent=67 // pred_region
          %s740 = sand.u32 %s169, 1
          %s741 = scalar_lea.sflag [#allocation5], %s740
          %s742 = sand.u32 %s169, 1
          %s743 = smul.addr %s742, 8
          %s744 = scalar_lea.vmem [#allocation9], %s743
          %745 = dma.done %s741, 128
        $region72: #{tpu_custom_call.1} parent=67 // pred_fallthru
          _
      $region68: #{tpu_custom_call.1} parent=5 // pred_fallthru
        _
    $region6: #{tpu_custom_call.1} parent=1 // loop_footer
      %s22 = sadd.s32 1, %s18
    $region7: #{tpu_custom_call.1} parent=1 // loop_footer_branch
      %17 = sbr.rel target = $region3
    $region8: #{tpu_custom_call.1} parent=1 // loop_exit
      _
    %746 = vsyncpa [#allocation4], 1
    %s747 = scalar_lea.sflag [#allocation4], 1
    %748 = vsyncpa %s747, 1
    %749 = vsyncpa [#allocation7], 1
    %750 = vsyncpa [#allocation5], 1
    %s751 = scalar_lea.sflag [#allocation5], 1
    %752 = vsyncpa %s751, 1

</llo_original>
